<compile_context>
chip_gen: v5e
topology: v5e:2x2
jax: 0.10.0
libtpu: 0.0.40
codegen_flags: <defaults>
</compile_context>

<pallas_src>
import functools
import numpy as np
import jax
import jax.numpy as jnp
from jax.experimental import pallas as pl
from jax.experimental.pallas import tpu as pltpu

_HI = jax.lax.Precision.HIGHEST            # only used by the pure-JAX reference

_PHASES = ((0, 0), (0, 1), (1, 0), (1, 1))  # output phase order p = ry*2 + rx
_OFFS = ((0, 0), (0, 1), (1, 0), (1, 1))    # (ty, tx) chunk order along K = 4*Cin


# ---------------------------------------------------------------------------
# Generation-aware VMEM budgets
# ---------------------------------------------------------------------------
@functools.lru_cache(maxsize=1)
def _vmem_config():
    """Returns (vmem_limit_bytes, per-step budget bytes, two_tensorcores)."""
    try:
        cap = int(pltpu.get_tpu_info().vmem_capacity_bytes)
    except Exception:
        cap = 64 * 1024 * 1024                       # conservative fallback
    if cap <= 80 * 1024 * 1024:                      # v7x-class: 64 MiB/TC, 2 TCs/chip
        return 48 * 1024 * 1024, 20 * 1024 * 1024, True
    return 100 * 1024 * 1024, 40 * 1024 * 1024, False  # v5e/v6e: 128 MiB, 1 TC


def _round_up(x, m):
    return ((x + m - 1) // m) * m


def _padded_bytes(shape, dtype):
    """VMEM footprint of a block including (sublane, lane) tiling padding."""
    itemsize = jnp.dtype(dtype).itemsize
    shape = tuple(shape)
    if len(shape) < 2:
        shape = (1,) * (2 - len(shape)) + shape
    lead = int(np.prod(shape[:-2], dtype=np.int64))
    sub = _round_up(shape[-2], 8 * 4 // itemsize)    # 8 sublanes f32, 16 bf16
    lane = _round_up(shape[-1], 128)
    return int(lead * sub * lane * itemsize)


def _pick_tile(dim, target, align):
    """Largest divisor of `dim` that is <= target and aligned, else the full dim."""
    if dim <= target:
        return dim
    for d in range(target, 0, -1):
        if dim % d == 0 and d % align == 0:
            return d
    return dim


# ---------------------------------------------------------------------------
# Linear kernel: tiled (M, N, K) matmul with f32 accumulator scratch
# ---------------------------------------------------------------------------
def _linear_kernel(x_ref, w_ref, b_ref, o_ref, acc_ref):
    @pl.when(pl.program_id(2) == 0)
    def _():
        acc_ref[...] = jnp.zeros_like(acc_ref)

    acc_ref[...] += jnp.dot(x_ref[...], w_ref[...],
                            preferred_element_type=jnp.float32)

    @pl.when(pl.program_id(2) == pl.num_programs(2) - 1)
    def _():
        o_ref[...] = (acc_ref[...] + b_ref[...].astype(jnp.float32)).astype(o_ref.dtype)


def pallas_linear(x, w, b, out_dtype=jnp.bfloat16):
    M, K = x.shape
    N = w.shape[1]
    vmem_limit, _, _ = _vmem_config()
    tm = _pick_tile(M, 512, 16)       # 16: bf16 sublane packing
    tk = _pick_tile(K, 512, 128)
    tn = _pick_tile(N, 512, 128)
    grid = (M // tm, N // tn, K // tk)
    return pl.pallas_call(
        _linear_kernel,
        out_shape=jax.ShapeDtypeStruct((M, N), out_dtype),
        grid=grid,
        in_specs=[
            pl.BlockSpec((tm, tk), lambda i, j, k: (i, k)),
            pl.BlockSpec((tk, tn), lambda i, j, k: (k, j)),
            pl.BlockSpec((1, tn), lambda i, j, k: (0, j)),
        ],
        out_specs=pl.BlockSpec((tm, tn), lambda i, j, k: (i, j)),
        scratch_shapes=[pltpu.VMEM((tm, tn), jnp.float32)],
        compiler_params=pltpu.CompilerParams(
            dimension_semantics=("parallel", "parallel", "arbitrary"),
            vmem_limit_bytes=vmem_limit),
    )(x, w, b.reshape(1, N))


# ---------------------------------------------------------------------------
# ConvTranspose2d(k=4, s=2, p=1) kernel: 4 per-phase matmuls, K = 4*Cin
# ---------------------------------------------------------------------------
def _deconv_kernel(x_ref, w_ref, b_ref, o_ref, xp_ref, *, merge_all_phases):
    Bt, H, W, Cin = x_ref.shape
    Cout = b_ref.shape[-1]
    M = Bt * H * W

    # Zero ONLY the 1-pixel border of the padded scratch (interior fully overwritten).
    # Done every step: with the batch axis 'parallel' each TensorCore has its own
    # private scratch, so gating on pl.program_id(0) == 0 would be unsafe on v7x.
    zr = jnp.zeros((Bt, 1, W + 2, Cin), xp_ref.dtype)
    zc = jnp.zeros((Bt, H + 2, 1, Cin), xp_ref.dtype)
    xp_ref[:, 0:1, :, :] = zr
    xp_ref[:, H + 1:H + 2, :, :] = zr
    xp_ref[:, :, 0:1, :] = zc
    xp_ref[:, :, W + 1:W + 2, :] = zc
    xp_ref[:, 1:H + 1, 1:W + 1, :] = x_ref[...]

    bias = b_ref[...].astype(jnp.float32)            # (1, Cout)

    # One matmul per output phase: phase (ry, rx) is a 2x2 conv on the padded input,
    # activation slab (M, 4*Cin) built from the 4 shifted windows, weights pre-packed
    # host-side as w_ref[ry*2+rx] of shape (4*Cin, Cout).
    results = []
    for (ry, rx) in _PHASES:
        parts = [xp_ref[:, ry + ty:ry + ty + H, rx + tx:rx + tx + W, :]
                 for (ty, tx) in _OFFS]
        a4 = jnp.concatenate(parts, axis=-1).reshape(M, 4 * Cin)
        r = jnp.dot(a4, w_ref[2 * ry + rx],
                    preferred_element_type=jnp.float32) + bias
        results.append(r)

    if merge_all_phases:
        # Final stage: all 4 phases lane-packed as channels -> one dense store.
        full = jnp.concatenate(results, axis=-1)      # (M, 4*Cout), order (ry, rx, c)
        o_ref[...] = full.reshape(Bt, H, W, 4 * Cout).astype(o_ref.dtype)
    else:
        # Lane-dense store: rx phase merged into the channel (lane) axis; the 2x2
        # phase interleave stays a pure row-major reshape in the wrapper.
        for ry in range(2):
            row = jnp.concatenate([results[2 * ry], results[2 * ry + 1]], axis=-1)
            o_ref[:, :, ry:ry + 1, :, :] = (
                row.reshape(Bt, H, 1, W, 2 * Cout).astype(o_ref.dtype))


def _deconv_vmem_bytes(Bt, H, W, Cin, Cout, out_dtype, merge_all_phases):
    bf = jnp.bfloat16
    M = Bt * H * W
    total = 0
    total += 2 * _padded_bytes((Bt, H, W, Cin), bf)               # input block (2 bufs)
    total += _padded_bytes((Bt, H + 2, W + 2, Cin), bf)           # padded scratch
    total += 2 * _padded_bytes((4, 4 * Cin, Cout), bf)            # packed weights (2 bufs)
    total += 2 * _padded_bytes((1, Cout), jnp.float32)            # bias
    if merge_all_phases:
        total += 2 * _padded_bytes((Bt, H, W, 4 * Cout), out_dtype)
    else:
        total += 2 * _padded_bytes((Bt, H, 2, W, 2 * Cout), out_dtype)
    total += 2 * _padded_bytes((M, 4 * Cin), bf)                  # phase slab temporaries
    total += 6 * _padded_bytes((M, Cout), jnp.float32)            # phase results / concats
    return total


def _pick_batch_tile(B, H, W, Cin, Cout, out_dtype, merge_all_phases):
    _, budget, two_tc = _vmem_config()
    divs = [d for d in range(1, B + 1) if B % d == 0]
    fits = [d for d in divs
            if _deconv_vmem_bytes(d, H, W, Cin, Cout, out_dtype, merge_all_phases)
            <= budget] or [1]
    if two_tc and B > 1:
        # keep an even number (>=2) of grid steps so both v7x TensorCores get work
        even = [d for d in fits if (B // d) >= 2 and (B // d) % 2 == 0]
        if even:
            return max(even)
        non_full = [d for d in fits if d < B]
        if non_full:
            return max(non_full)
    return max(fits)


def pallas_conv_transpose2d(x, w_pk, bias, out_dtype, merge_all_phases=False):
    """ConvTranspose2d(kernel=4, stride=2, padding=1): (B,H,W,Cin) -> 2x upsample."""
    B, H, W, Cin = x.shape
    Cout = bias.shape[-1]
    vmem_limit, _, _ = _vmem_config()
    Bt = _pick_batch_tile(B, H, W, Cin, Cout, out_dtype, merge_all_phases)
    grid = (B // Bt,)
    # TODO(synk): tile H with a halo'd manual DMA before decoding images much larger
    # than ~128x128 (late-stage blocks would otherwise exceed v7x's 64 MiB VMEM).

    if merge_all_phases:
        out_shape = jax.ShapeDtypeStruct((B, H, W, 4 * Cout), out_dtype)
        out_spec = pl.BlockSpec((Bt, H, W, 4 * Cout), lambda b: (b, 0, 0, 0))
    else:
        out_shape = jax.ShapeDtypeStruct((B, H, 2, W, 2 * Cout), out_dtype)
        out_spec = pl.BlockSpec((Bt, H, 2, W, 2 * Cout), lambda b: (b, 0, 0, 0, 0))

    out = pl.pallas_call(
        functools.partial(_deconv_kernel, merge_all_phases=merge_all_phases),
        out_shape=out_shape,
        grid=grid,
        in_specs=[
            pl.BlockSpec((Bt, H, W, Cin), lambda b: (b, 0, 0, 0)),
            pl.BlockSpec(w_pk.shape, lambda b: (0, 0, 0)),
            pl.BlockSpec((1, Cout), lambda b: (0, 0)),
        ],
        out_specs=out_spec,
        scratch_shapes=[pltpu.VMEM((Bt, H + 2, W + 2, Cin), x.dtype)],
        compiler_params=pltpu.CompilerParams(
            dimension_semantics=("parallel",),
            vmem_limit_bytes=vmem_limit),
    )(x, w_pk, bias)

    if merge_all_phases:
        return out.reshape(B, H, W, 2, 2, Cout)      # phases interleaved by the caller
    return out.reshape(B, 2 * H, 2 * W, Cout)        # pure row-major reshape


# ---------------------------------------------------------------------------
# Module
# ---------------------------------------------------------------------------
class ImageDecoderResnetPallas:
    def __init__(self, shape, input_dim, depth=96, blocks=0, resize='stride',
                 minres=4, sigmoid=False, act='silu', norm='layer', key=None):
        assert resize == 'stride'
        if blocks > 0:
            # TODO(synk): ResidualBlock path (blocks > 0) not implemented; default is 0.
            raise NotImplementedError("blocks > 0 not supported")
        self.shape = shape
        self.minres = minres
        self.stages = int(np.log2(shape[0]) - np.log2(minres))
        assert shape[0] == shape[1] == minres * 2 ** self.stages
        # TODO(synk): F.interpolate(mode='bilinear') fallback branch not implemented
        # (never triggers when shape[0] == shape[1] == minres * 2**stages).

        d0 = depth * 2 ** (self.stages - 1)
        key = jax.random.PRNGKey(0) if key is None else key

        # Linear(input_dim -> minres*minres*d0); torch stores (out, in), we use (in, out).
        k_lw, k_lb, key = jax.random.split(key, 3)
        n_out = minres * minres * d0
        self.lin_w = jax.random.normal(k_lw, (input_dim, n_out), jnp.float32) / np.sqrt(input_dim)
        self.lin_b = 0.01 * jax.random.normal(k_lb, (n_out,), jnp.float32)

        # Per-stage ConvTranspose2d weights, canonical layout (ky, kx, Cin, Cout).
        self.deconvs = []
        cur = d0
        for i in range(self.stages):
            out_ch = shape[2] * 2 if i == self.stages - 1 else cur // 2
            k_w, k_b, key = jax.random.split(key, 3)
            w = jax.random.normal(k_w, (4, 4, cur, out_ch), jnp.float32) / np.sqrt(cur * 16)
            b = 0.01 * jax.random.normal(k_b, (out_ch,), jnp.float32)
            self.deconvs.append((w, b))
            cur = out_ch

        # ---- Pallas-side packed parameters (host-side, once at init) ----
        # Linear: permute output columns (c, y, x) -> (y, x, c) so the kernel output
        # reshapes straight to NHWC; cast to bf16 for native MXU matmuls.
        K = input_dim
        w_nhwc = self.lin_w.reshape(K, d0, minres, minres).transpose(0, 2, 3, 1).reshape(K, n_out)
        b_nhwc = self.lin_b.reshape(d0, minres, minres).transpose(1, 2, 0).reshape(n_out)
        self.lin_w_pk = w_nhwc.astype(jnp.bfloat16)
        self.lin_b_pk = b_nhwc.astype(jnp.float32)

        # Deconv stages: prune the never-used half of the final stage's channels
        # (torch.chunk(x, 2)[0]), fold +0.5 into its bias, and pack PER-PHASE weights:
        # phase (ry, rx) uses taps w[3-ry-2*ty, 3-rx-2*tx] stacked along K, giving a
        # single (4, 4*Cin, Cout) bf16 array per stage.
        self.stage_params = []
        for i, (w, b) in enumerate(self.deconvs):
            if i == self.stages - 1:
                keep = shape[2]
                w_use, b_use = w[..., :keep], b[:keep] + 0.5
                out_dtype = jnp.float32
            else:
                w_use, b_use, out_dtype = w, b, jnp.bfloat16
            cout = w_use.shape[-1]
            phases = []
            for ry in (0, 1):
                for rx in (0, 1):
                    chunks = [w_use[3 - ry - 2 * ty, 3 - rx - 2 * tx]
                              for (ty, tx) in _OFFS]
                    phases.append(jnp.concatenate(chunks, axis=0))   # (4*Cin, Cout)
            w_pk = jnp.stack(phases, axis=0).astype(jnp.bfloat16)    # (4, 4*Cin, Cout)
            self.stage_params.append(
                (w_pk, b_use.reshape(1, cout).astype(jnp.float32), out_dtype))

    def __call__(self, x):
        B = x.shape[0]
        h = pallas_linear(x.astype(jnp.bfloat16), self.lin_w_pk, self.lin_b_pk)
        h = h.reshape(B, self.minres, self.minres, -1)       # NHWC (columns pre-permuted)
        for i, (w_pk, bias, out_dtype) in enumerate(self.stage_params):
            last = (i == self.stages - 1)
            h = pallas_conv_transpose2d(h, w_pk, bias, out_dtype,
                                        merge_all_phases=last)
        # h: (B, H, W, 2, 2, C) with all 4 phases lane-packed by the last stage; the
        # +0.5 and torch.chunk(...)[0] are already folded in.  One tiny XLA transpose
        # interleaves the phases and yields the NCHW MSEDist mean directly.
        B, Hh, Ww, _, _, C = h.shape
        return jnp.transpose(h, (0, 5, 1, 3, 2, 4)).reshape(B, C, 2 * Hh, 2 * Ww)

    # Pure-JAX f32 reference (XLA convs, HIGHEST precision) for correctness checking.
    def reference(self, x):
        h = jnp.dot(x, self.lin_w, precision=_HI) + self.lin_b
        d0 = h.shape[1] // (self.minres * self.minres)
        h = h.reshape(x.shape[0], d0, self.minres, self.minres)   # NCHW
        for w, b in self.deconvs:
            # transposed conv == dilated conv with spatially flipped, transposed kernel
            k = jnp.transpose(w[::-1, ::-1], (3, 2, 0, 1))        # (Cout, Cin, 4, 4)
            h = jax.lax.conv_general_dilated(
                h, k, window_strides=(1, 1), padding=((2, 2), (2, 2)),
                lhs_dilation=(2, 2),
                dimension_numbers=('NCHW', 'OIHW', 'NCHW'),
                precision=_HI) + b[None, :, None, None]
        h = h + 0.5
        return h[:, : h.shape[1] // 2]


# ---------------------------------------------------------------------------
if __name__ == "__main__":
    shape = (16, 16, 3)    # (H, W, C) of the decoded image
    input_dim = 32
    batch = 2

    key = jax.random.PRNGKey(0)
    k_model, k_x = jax.random.split(key)

    model = ImageDecoderResnetPallas(shape, input_dim, depth=16, blocks=0,
                                     minres=4, key=k_model)
    x = jax.random.normal(k_x, (batch, input_dim), jnp.float32)

    mean = jax.block_until_ready(model(x))
    assert mean.shape == (batch, shape[2], shape[0], shape[1]), mean.shape

    ref = jax.block_until_ready(model.reference(x))
    # bf16 MXU inputs (f32 accumulation) vs. the f32 HIGHEST-precision reference.
    np.testing.assert_allclose(np.asarray(mean), np.asarray(ref), rtol=6e-2, atol=6e-2)

    print("KERNEL_OK")
</pallas_src>

<mosaic_0001>
module attributes {stable_mosaic.version = 11 : i64} {
  func.func @_linear_kernel(%arg0: i32, %arg1: i32, %arg2: i32, %arg3: memref<2x32xbf16, #tpu.memory_space<vmem>>, %arg4: memref<32x512xbf16, #tpu.memory_space<vmem>>, %arg5: memref<1x512xf32, #tpu.memory_space<vmem>>, %arg6: memref<2x512xbf16, #tpu.memory_space<vmem>>, %arg7: memref<2x512xf32, #tpu.memory_space<vmem>>) attributes {dimension_semantics = [#tpu.dimension_semantics<parallel>, #tpu.dimension_semantics<parallel>, #tpu.dimension_semantics<arbitrary>], iteration_bounds = array<i64: 1, 1, 1>, scalar_prefetch = 0 : i64, scratch_operands = 1 : i64, tpu.core_type = #tpu.core_type<tc>, window_params = [{transform_indices = @transform_0, window_bounds = array<i64: 2, 32>}, {transform_indices = @transform_1, window_bounds = array<i64: 32, 512>}, {transform_indices = @transform_2, window_bounds = array<i64: 1, 512>}, {transform_indices = @transform_3, window_bounds = array<i64: 2, 512>}]} {
    %c0_i32 = arith.constant 0 : i32
    %0 = arith.cmpi eq, %arg2, %c0_i32 : i32
    %1 = arith.extui %0 : i1 to i32
    %c0_i32_0 = arith.constant 0 : i32
    %2 = arith.cmpi ne, %1, %c0_i32_0 : i32
    scf.if %2 {
      %cst_10 = arith.constant 0.000000e+00 : f32
      %12 = vector.broadcast %cst_10 : f32 to vector<2x512xf32>
      %c0_11 = arith.constant 0 : index
      %c0_12 = arith.constant 0 : index
      %13 = vector.load %arg7[%c0_11, %c0_12] : memref<2x512xf32, #tpu.memory_space<vmem>>, vector<2x512xf32>
      tpu.vector_store %arg7[%c0_11, %c0_12], %12 {strides = array<i32>} : memref<2x512xf32, #tpu.memory_space<vmem>>, vector<2x512xf32>,
    } else {
    }
    %c0 = arith.constant 0 : index
    %c0_1 = arith.constant 0 : index
    %3 = vector.load %arg7[%c0, %c0_1] : memref<2x512xf32, #tpu.memory_space<vmem>>, vector<2x512xf32>
    %c0_2 = arith.constant 0 : index
    %c0_3 = arith.constant 0 : index
    %4 = vector.load %arg3[%c0_2, %c0_3] : memref<2x32xbf16, #tpu.memory_space<vmem>>, vector<2x32xbf16>
    %c0_4 = arith.constant 0 : index
    %c0_5 = arith.constant 0 : index
    %5 = vector.load %arg4[%c0_4, %c0_5] : memref<32x512xbf16, #tpu.memory_space<vmem>>, vector<32x512xbf16>
    %cst = arith.constant dense<0.000000e+00> : vector<2x512xf32>
    %6 = tpu.matmul %4, %5, %cst {dimension_numbers = #tpu.dot_dimension_numbers<[1], [0], [0], [1], [0, 0, 1, 1], [], []>} : vector<2x32xbf16>, vector<32x512xbf16>, vector<2x512xf32> -> vector<2x512xf32>
    %7 = arith.addf %3, %6 : vector<2x512xf32>
    %c0_6 = arith.constant 0 : index
    %c0_7 = arith.constant 0 : index
    %8 = vector.load %arg7[%c0_6, %c0_7] : memref<2x512xf32, #tpu.memory_space<vmem>>, vector<2x512xf32>
    tpu.vector_store %arg7[%c0_6, %c0_7], %7 {strides = array<i32>} : memref<2x512xf32, #tpu.memory_space<vmem>>, vector<2x512xf32>,
    %c0_i32_8 = arith.constant 0 : i32
    %9 = arith.cmpi eq, %arg2, %c0_i32_8 : i32
    %10 = arith.extui %9 : i1 to i32
    %c0_i32_9 = arith.constant 0 : i32
    %11 = arith.cmpi ne, %10, %c0_i32_9 : i32
    scf.if %11 {
      %c0_10 = arith.constant 0 : index
      %c0_11 = arith.constant 0 : index
      %12 = vector.load %arg7[%c0_10, %c0_11] : memref<2x512xf32, #tpu.memory_space<vmem>>, vector<2x512xf32>
      %c0_12 = arith.constant 0 : index
      %c0_13 = arith.constant 0 : index
      %13 = vector.load %arg5[%c0_12, %c0_13] : memref<1x512xf32, #tpu.memory_space<vmem>>, vector<1x512xf32>
      %14 = vector.broadcast %13 : vector<1x512xf32> to vector<2x512xf32>
      %15 = arith.addf %12, %14 : vector<2x512xf32>
      %16 = arith.truncf %15 : vector<2x512xf32> to vector<2x512xbf16>
      %c0_14 = arith.constant 0 : index
      %c0_15 = arith.constant 0 : index
      %17 = vector.load %arg6[%c0_14, %c0_15] : memref<2x512xbf16, #tpu.memory_space<vmem>>, vector<2x512xbf16>
      tpu.vector_store %arg6[%c0_14, %c0_15], %16 {strides = array<i32>} : memref<2x512xbf16, #tpu.memory_space<vmem>>, vector<2x512xbf16>,
    } else {
    }
    return
  }
  func.func @transform_0(%arg0: i32, %arg1: i32, %arg2: i32) -> (i32, i32) {
    %c0_i32 = arith.constant 0 : i32
    return %arg0, %arg2 : i32, i32
  }
  func.func @transform_1(%arg0: i32, %arg1: i32, %arg2: i32) -> (i32, i32) {
    %c0_i32 = arith.constant 0 : i32
    return %arg2, %arg1 : i32, i32
  }
  func.func @transform_2(%arg0: i32, %arg1: i32, %arg2: i32) -> (i32, i32) {
    %c0_i32 = arith.constant 0 : i32
    %c0_i32_0 = arith.constant 0 : i32
    return %c0_i32, %arg1 : i32, i32
  }
  func.func @transform_3(%arg0: i32, %arg1: i32, %arg2: i32) -> (i32, i32) {
    %c0_i32 = arith.constant 0 : i32
    return %arg0, %arg1 : i32, i32
  }
}

</mosaic_0001>

<llo_original>
// kernel: tpu_custom_call.1
$region0: #{tpu_custom_call.1}
  #allocation0 [shape = 'u32[]', space=smem, size = 0x4, offset = 0x4, fixed_abs, tag = 'smem constant byte address 0x4 - core index']
  #allocation1 [shape = 'u32[72,128]{1,0:T(1,128)}', space=vmem, size = 0x9000, scoped, tag = 'internal scratch']
  #allocation2 [shape = 'f32[2,512]{1,0:T(2,128)}', space=vmem, size = 0x1000, scoped, tag = 'scratch operand']
  %s0 = inlined_call_operand.hbm [shape: bf16[2,32], index: 0, kind: input, shape index: {}]
  %s1 = inlined_call_operand.hbm [shape: bf16[32,512], index: 1, kind: input, shape index: {}]
  %s2 = inlined_call_operand.hbm [shape: f32[1,512], index: 2, kind: input, shape index: {}]
  %s3 = inlined_call_operand.hbm [shape: bf16[2,512], index: 3, kind: output, shape index: {}]
  %s4 = sld [smem:[#allocation0]]
  $region42: #{tpu_custom_call.1} parent=0
    _
  %s6 = ssub.s32 1, %s4
  %s7 = scalar_select 0, %s6, %s4
  $region1: #{tpu_custom_call.1} parent=0
    #allocation3 [shape = 'u8[512]{0}', space=vmem, size = 0x400, scoped, tag = 'input window, operand 0, single buffered']
    #allocation4 [shape = 's32[1]{0}', space=sflag, size = 0x4, scoped, tag = 'scoped memory for tpu_custom_call.1']
    #allocation5 [shape = 's32[1]{0}', space=sflag, size = 0x4, scoped, tag = 'scoped memory for tpu_custom_call.1']
    #allocation6 [shape = 'u8[32768]{0}', space=vmem, size = 0x8000, scoped, tag = 'input window, operand 1, single buffered']
    #allocation7 [shape = 's32[1]{0}', space=sflag, size = 0x4, scoped, tag = 'scoped memory for tpu_custom_call.1']
    #allocation8 [shape = 'u8[2048]{0}', space=vmem, size = 0x800, scoped, tag = 'input window, operand 2, single buffered']
    #allocation9 [shape = 'u8[2048]{0}', space=vmem, size = 0x800, scoped, tag = 'output window, operand 0, single buffered']
    %8 = vsyncpa [#allocation4], 0
    %9 = vsyncpa [#allocation7], 0
    %10 = vsyncpa [#allocation5], 0
    // Predicated region
    $region2: #{tpu_custom_call.1} parent=1 // pred_check
      _
    $region3: #{tpu_custom_call.1} parent=1 // pred_check_branch
      %12 = sbr.rel (0) target = $region5
    $region4: #{tpu_custom_call.1} parent=1 // pred_region
      %14 = vsyncadd [#allocation4], 0
      %s16 = sshll.u32 %s0, 4
      %s17 = int_to_ptr.hbm [resolvable:$true] %s16
      %s18 = sshll.u32 [#allocation3], 4
      %s19 = int_to_ptr.vmem [resolvable:$true] %s18
      %21 = dma.hbm_to_vmem [thread:$0]  %s17, 16, %s19, [#allocation4]
    $region5: #{tpu_custom_call.1} parent=1 // pred_fallthru
      _
    // Predicated region
    $region6: #{tpu_custom_call.1} parent=1 // pred_check
      _
    $region7: #{tpu_custom_call.1} parent=1 // pred_check_branch
      %23 = sbr.rel (0) target = $region9
    $region8: #{tpu_custom_call.1} parent=1 // pred_region
      %25 = vsyncadd [#allocation7], 0
      %s26 = sshll.u32 %s1, 4
      %s27 = int_to_ptr.hbm [resolvable:$true] %s26
      %s28 = sshll.u32 [#allocation6], 4
      %s29 = int_to_ptr.vmem [resolvable:$true] %s28
      %34 = dma.hbm_to_vmem [thread:$0]  %s27, 1024, %s29, [#allocation7], 256, 256, 16
    $region9: #{tpu_custom_call.1} parent=1 // pred_fallthru
      _
    // Predicated region
    $region10: #{tpu_custom_call.1} parent=1 // pred_check
      _
    $region11: #{tpu_custom_call.1} parent=1 // pred_check_branch
      %36 = sbr.rel (0) target = $region13
    $region12: #{tpu_custom_call.1} parent=1 // pred_region
      %38 = vsyncadd [#allocation7], 0
      %s40 = sshll.u32 %s2, 4
      %s41 = int_to_ptr.hbm [resolvable:$true] %s40
      %s42 = sshll.u32 [#allocation8], 4
      %s43 = int_to_ptr.vmem [resolvable:$true] %s42
      %45 = dma.hbm_to_vmem [thread:$0]  %s41, 64, %s43, [#allocation7]
    $region13: #{tpu_custom_call.1} parent=1 // pred_fallthru
      _
    // Predicated region
    $region14: #{tpu_custom_call.1} parent=1 // pred_check
      _
    $region15: #{tpu_custom_call.1} parent=1 // pred_check_branch
      %47 = sbr.rel (0) target = $region17
    $region16: #{tpu_custom_call.1} parent=1 // pred_region
      %49 = dma.done [#allocation4], 16
    $region17: #{tpu_custom_call.1} parent=1 // pred_fallthru
      _
    // Predicated region
    $region18: #{tpu_custom_call.1} parent=1 // pred_check
      _
    $region19: #{tpu_custom_call.1} parent=1 // pred_check_branch
      %51 = sbr.rel (0) target = $region21
    $region20: #{tpu_custom_call.1} parent=1 // pred_region
      %53 = dma.done [#allocation7], 1024
    $region21: #{tpu_custom_call.1} parent=1 // pred_fallthru
      _
    // Predicated region
    $region22: #{tpu_custom_call.1} parent=1 // pred_check
      _
    $region23: #{tpu_custom_call.1} parent=1 // pred_check_branch
      %55 = sbr.rel (0) target = $region25
    $region24: #{tpu_custom_call.1} parent=1 // pred_region
      %57 = dma.done [#allocation7], 64
    $region25: #{tpu_custom_call.1} parent=1 // pred_fallthru
      _
    %p59 = scmp.eq.s32.totalorder 0, 0
    // Predicated region
    $region26: #{tpu_custom_call.1} parent=1 // pred_check
      %p60 = pneg %p59
    $region27: #{tpu_custom_call.1} parent=1 // pred_check_branch
      %62 = sbr.rel (%p60) target = $region29
    $region28: #{tpu_custom_call.1} parent=1 // pred_region
      %63 = vst [vmem:[#allocation2] sm:$0xff] 0.0
    $region29: #{tpu_custom_call.1} parent=1 // pred_fallthru
      _
    %v64 = vld [vmem:[#allocation2] sm:$0xff]
    %v65 = vld [vmem:[#allocation3] sm:$0x1]
    %v66 = vld [vmem:[#allocation6] sm:$0xff]
    %v67 = vld [vmem:[#allocation6 + $0x8] sm:$0xff]
    %v68 = vld [vmem:[#allocation6 + $0x10] sm:$0xff]
    %v69 = vld [vmem:[#allocation6 + $0x18] sm:$0xff]
    %v70 = vld [vmem:[#allocation6 + $0x20] sm:$0xff]
    %v71 = vld [vmem:[#allocation6 + $0x28] sm:$0xff]
    %v72 = vld [vmem:[#allocation6 + $0x30] sm:$0xff]
    %v73 = vld [vmem:[#allocation6 + $0x38] sm:$0xff]
    %v82 = vunpack.c.l.b16 %v66
    %v83 = vunpack.c.h.b16 %v66
    %v84 = vunpack.c.l.b16 %v67
    %v85 = vunpack.c.h.b16 %v67
    %v86 = vunpack.c.l.b16 %v68
    %v87 = vunpack.c.h.b16 %v68
    %v88 = vunpack.c.l.b16 %v69
    %v89 = vunpack.c.h.b16 %v69
    %v90 = vunpack.c.l.b16 %v70
    %v91 = vunpack.c.h.b16 %v70
    %v92 = vunpack.c.l.b16 %v71
    %v93 = vunpack.c.h.b16 %v71
    %v94 = vunpack.c.l.b16 %v72
    %v95 = vunpack.c.h.b16 %v72
    %v96 = vunpack.c.l.b16 %v73
    %v97 = vunpack.c.h.b16 %v73
    %v98 = vpack.c.b16 %v86, %v82
    %v99 = vpack.c.b16 %v87, %v83
    %v100 = vpack.c.b16 %v88, %v84
    %v101 = vpack.c.b16 %v89, %v85
    %v102 = vpack.c.b16 %v94, %v90
    %v103 = vpack.c.b16 %v95, %v91
    %v104 = vpack.c.b16 %v96, %v92
    %v105 = vpack.c.b16 %v97, %v93
    %vm114 = vcmask 261120
    %v116 = vsel %vm114, %v65, 0
    %118 = vmatpush.bf16.msra.mxu0 0
    %119 = vmatpush.bf16.msra.mxu0 0
    %120 = vmatpush.bf16.msra.mxu0 0
    %121 = vmatpush.bf16.msra.mxu0 0
    %122 = vmatpush.bf16.msra.mxu0 0
    %123 = vmatpush.bf16.msra.mxu0 0
    %124 = vmatpush.bf16.msra.mxu0 %v102
    %125 = vmatpush.bf16.msra.mxu0 %v98
    %126 = vmatmul.bf16.gmra.mxu0 %v116
    %v127 = vpop.f32.mrf.mxu0
    %v128 = vadd.f32 0.0, %v127
    %v129 = vpop.f32.mrf.mxu0
    %130 = vdwg.mxu0
    %131 = vmatpush.bf16.msra.mxu0 0
    %132 = vmatpush.bf16.msra.mxu0 0
    %133 = vmatpush.bf16.msra.mxu0 0
    %134 = vmatpush.bf16.msra.mxu0 0
    %135 = vmatpush.bf16.msra.mxu0 0
    %136 = vmatpush.bf16.msra.mxu0 0
    %137 = vmatpush.bf16.msra.mxu0 %v103
    %138 = vmatpush.bf16.msra.mxu0 %v99
    %139 = vmatmul.bf16.gmra.mxu0 %v116
    %v140 = vpop.f32.mrf.mxu0
    %v141 = vadd.f32 0.0, %v140
    %v142 = vpop.f32.mrf.mxu0
    %143 = vdwg.mxu0
    %144 = vmatpush.bf16.msra.mxu0 0
    %145 = vmatpush.bf16.msra.mxu0 0
    %146 = vmatpush.bf16.msra.mxu0 0
    %147 = vmatpush.bf16.msra.mxu0 0
    %148 = vmatpush.bf16.msra.mxu0 0
    %149 = vmatpush.bf16.msra.mxu0 0
    %150 = vmatpush.bf16.msra.mxu0 %v104
    %151 = vmatpush.bf16.msra.mxu0 %v100
    %152 = vmatmul.bf16.gmra.mxu0 %v116
    %v153 = vpop.f32.mrf.mxu0
    %v154 = vadd.f32 0.0, %v153
    %v155 = vpop.f32.mrf.mxu0
    %156 = vdwg.mxu0
    %157 = vmatpush.bf16.msra.mxu0 0
    %158 = vmatpush.bf16.msra.mxu0 0
    %159 = vmatpush.bf16.msra.mxu0 0
    %160 = vmatpush.bf16.msra.mxu0 0
    %161 = vmatpush.bf16.msra.mxu0 0
    %162 = vmatpush.bf16.msra.mxu0 0
    %163 = vmatpush.bf16.msra.mxu0 %v105
    %164 = vmatpush.bf16.msra.mxu0 %v101
    %165 = vmatmul.bf16.gmra.mxu0 %v116
    %v166 = vpop.f32.mrf.mxu0
    %v167 = vadd.f32 0.0, %v166
    %v168 = vpop.f32.mrf.mxu0
    %169 = vdwg.mxu0
    %v174 = vrot.slane %v141, 6
    %v175 = vrot.slane %v154, 4
    %v176 = vrot.slane %v167, 2
    %vm177 = vcmask 1041408
    %v178 = vsel %vm177, %v128, %v174
    %vm179 = vcmask 1045508
    %v180 = vsel %vm179, %v175, %v176
    %vm181 = vcmask 1043456
    %v182 = vsel %vm181, %v178, %v180
    %v184 = vadd.f32 %v64, %v182
    %185 = vst [vmem:[#allocation2] sm:$0xff] %v184
    // Predicated region
    $region30: #{tpu_custom_call.1} parent=1 // pred_check
      %p186 = pneg %p59
    $region31: #{tpu_custom_call.1} parent=1 // pred_check_branch
      %188 = sbr.rel (%p186) target = $region33
    $region32: #{tpu_custom_call.1} parent=1 // pred_region
      %v189 = vld [vmem:[#allocation2] sm:$0xff]
      %v190 = vld [vmem:[#allocation8] sm:$0xf]
      %v192 = vperm.slane %v190, 0
      %v193 = vperm.slane %v190, 1
      %v194 = vperm.slane %v190, 2
      %v195 = vperm.slane %v190, 3
      %v196 = vrot.slane %v193, 6
      %v197 = vrot.slane %v194, 4
      %v198 = vrot.slane %v195, 2
      %v199 = vsel %vm177, %v192, %v196
      %v200 = vsel %vm179, %v197, %v198
      %v201 = vsel %vm181, %v199, %v200
      %v203 = vadd.f32 %v189, %v201
      %205 = vst [vmem:[#allocation1] ss:$4 sm:$0xff] %v203
      %v206 = vld.sshfl [vmem:[#allocation1] sm:$0xff pattern:$0x73625140]
      %v207 = vld.sshfl [vmem:[#allocation1 + $0x8] sm:$0xff pattern:$0x73625140]
      %v208 = vld.sshfl [vmem:[#allocation1 + $0x10] sm:$0xff pattern:$0x73625140]
      %v209 = vld.sshfl [vmem:[#allocation1 + $0x18] sm:$0xff pattern:$0x73625140]
      %v214 = vpack.c.bf16 %v207, %v206
      %v215 = vpack.c.bf16 %v209, %v208
      %v218 = vrot.slane %v214, 3
      %v219 = vrot.slane %v215, 6
      %v220 = vrot.slane %v215, 1
      %vm221 = vcmask 1040384
      %v224 = vsel %vm221, %v214, %v218
      %vm225 = vcmask 1042434
      %v228 = vsel %vm225, %v219, %v220
      %v229 = vsel %vm177, %v224, %v228
      %231 = vst [vmem:[#allocation9] sm:$0xf] %v229
    $region33: #{tpu_custom_call.1} parent=1 // pred_fallthru
      _
    // Predicated region
    $region34: #{tpu_custom_call.1} parent=1 // pred_check
      _
    $region35: #{tpu_custom_call.1} parent=1 // pred_check_branch
      %233 = sbr.rel (0) target = $region37
    $region36: #{tpu_custom_call.1} parent=1 // pred_region
      %235 = vsyncadd [#allocation5], 0
      %s237 = sshll.u32 [#allocation9], 4
      %s238 = int_to_ptr.vmem [resolvable:$true] %s237
      %s239 = sshll.u32 %s3, 4
      %s240 = int_to_ptr.hbm [resolvable:$true] %s239
      %242 = dma.vmem_to_hbm [thread:$0]  %s238, 64, %s240, [#allocation5]
    $region37: #{tpu_custom_call.1} parent=1 // pred_fallthru
      _
    // Predicated region
    $region38: #{tpu_custom_call.1} parent=1 // pred_check
      _
    $region39: #{tpu_custom_call.1} parent=1 // pred_check_branch
      %244 = sbr.rel (0) target = $region41
    $region40: #{tpu_custom_call.1} parent=1 // pred_region
      %246 = dma.done [#allocation5], 64
    $region41: #{tpu_custom_call.1} parent=1 // pred_fallthru
      _
    %247 = vsyncpa [#allocation4], 1
    %248 = vsyncpa [#allocation7], 1
    %249 = vsyncpa [#allocation5], 1

</llo_original>
